<compile_context>
chip_gen: v7x
topology: tpu7x:2x2x1
jax: 0.10.0
libtpu: 0.0.40
codegen_flags: <defaults>
</compile_context>

<pallas_src>
import jax
import jax.numpy as jnp
from jax import lax
from jax.experimental import pallas as pl
from jax.experimental.pallas import tpu as pltpu


def _round_up(x, m):
    return ((x + m - 1) // m) * m


def _choose_tile(total, target, align=128):
    """Largest tile <= target that is a multiple of `align`, preferring one
    that divides `total` (so no padding / trailing slice is needed).
    Returns (tile, padded_total)."""
    target = max(align, min(target, _round_up(total, align)))
    target = (target // align) * align
    for t in range(target, 0, -align):
        if total % t == 0:
            return t, total
    return target, _round_up(total, target)


# ----------------------------------------------------------------------------
# Kernel 1: fused conv1 (patch matmul, normalization + BN scale folded into
# the weights) + BN shift + ReLU.
#   weights  [OC, CKKp]      bf16, resident
#   patches  [CKKp, TILE_M]  bf16, streamed per grid step
#   shift    [OC, 1]         f32, resident
#   output   [OC, TILE_M]    bf16, lane-dense stores
# ----------------------------------------------------------------------------
def _conv_bn_relu_kernel(w_ref, p_ref, shift_ref, o_ref):
    acc = jnp.dot(w_ref[...], p_ref[...], preferred_element_type=jnp.float32)
    o_ref[...] = jnp.maximum(acc + shift_ref[...], 0.0).astype(o_ref.dtype)


def _im2col(xpad, k, stride, oh, ow):
    # Pure data-movement glue; XLA fuses it (with the pad/cast) into the single
    # producer that writes the [N, CKK, M] patch stream.
    n, c = xpad.shape[0], xpad.shape[1]
    cols = []
    for dh in range(k):
        for dw in range(k):
            cols.append(
                xpad[:, :, dh:dh + stride * oh:stride, dw:dw + stride * ow:stride])
    p = jnp.stack(cols, axis=2)                       # [N, C, K*K, OH, OW]
    return p.reshape(n, c * k * k, oh * ow)           # [N, CKK, M]


def conv1_bn_relu(images_raw, pixel_mean, pixel_std, conv_w,
                  bn_gamma, bn_beta, bn_mean, bn_var, eps=1e-5,
                  tile_m=2048, out_dtype=jnp.bfloat16):
    """conv1(7x7, s2, p3, no bias) + eval BatchNorm + ReLU applied to the
    normalized image ((x - mean)/std), with 1/std and the BN scale folded into
    the conv weights.  Returns NCHW activations in `out_dtype`."""
    OC, C, K, _ = conv_w.shape
    N, _, H, W = images_raw.shape
    stride, pad = 2, 3

    OH = (H + 2 * pad - K) // stride + 1
    OW = (W + 2 * pad - K) // stride + 1
    M = OH * OW
    CKK = C * K * K
    CKK_pad = _round_up(CKK, 16)                       # 147 -> 160 (bf16 sublane)

    tile_m, M_pad = _choose_tile(M, tile_m, 128)
    n_tiles = M_pad // tile_m

    # Folding:  conv_{w/std * bn_scale}(x - mean) == bn_scale * conv_w((x - mean)/std)
    inv_std = (1.0 / pixel_std).astype(jnp.float32)
    bn_scale = (bn_gamma / jnp.sqrt(bn_var + eps)).astype(jnp.float32)
    bn_shift = (bn_beta - bn_mean * bn_scale).astype(jnp.float32)
    w_folded = (conv_w.astype(jnp.float32)
                * inv_std.reshape(1, C, 1, 1)
                * bn_scale.reshape(OC, 1, 1, 1))

    # Mean subtraction in f32 (cheap XLA pass over the 3-channel image); zero
    # spatial padding then matches zero padding of the normalized image exactly.
    x = images_raw.astype(jnp.float32) - pixel_mean.reshape(1, C, 1, 1).astype(jnp.float32)
    xpad = jnp.pad(x, ((0, 0), (0, 0), (pad, pad), (pad, pad)))
    xpad = xpad.astype(jnp.bfloat16)

    patches = _im2col(xpad, K, stride, OH, OW)          # [N, CKK, M] bf16
    patches = jnp.pad(patches, ((0, 0), (0, CKK_pad - CKK), (0, M_pad - M)))

    w2d = jnp.pad(w_folded.reshape(OC, CKK), ((0, 0), (0, CKK_pad - CKK)))
    w2d = w2d.astype(jnp.bfloat16)                      # [OC, CKKp]
    shift2d = bn_shift.reshape(OC, 1)                   # [OC, 1] f32

    out = pl.pallas_call(
        _conv_bn_relu_kernel,
        out_shape=jax.ShapeDtypeStruct((N, OC, M_pad), out_dtype),
        grid=(N, n_tiles),
        in_specs=[
            pl.BlockSpec((OC, CKK_pad), lambda n, m: (0, 0)),            # resident
            pl.BlockSpec((None, CKK_pad, tile_m), lambda n, m: (n, 0, m)),
            pl.BlockSpec((OC, 1), lambda n, m: (0, 0)),                  # resident
        ],
        out_specs=pl.BlockSpec((None, OC, tile_m), lambda n, m: (n, 0, m)),
        compiler_params=pltpu.CompilerParams(
            dimension_semantics=("parallel", "parallel"),
            vmem_limit_bytes=32 * 1024 * 1024),
    )(w2d, patches, shift2d)

    if M_pad != M:
        out = out[:, :, :M]
    return out.reshape(N, OC, OH, OW)                   # layout-free reshape


# ----------------------------------------------------------------------------
# Kernel 2: semantic_inference
#   softmax(mask_cls)[:, :-1] computed once in XLA -> resident [Q, C] input
#   sigmoid(mask_pred tile) per H*W tile, contraction over Q on the MXU
#   output [C, TILE_HW] bf16, lane-dense
# ----------------------------------------------------------------------------
def _semantic_inference_kernel(cls_ref, mask_ref, o_ref):
    probs = cls_ref[...].astype(jnp.bfloat16)                     # [Q, C]
    # sigmoid kept in f32 for portability to v5e (no bf16 EUP); on v6e/v7x a
    # bf16 sigmoid would save two VPU pack passes (minor: kernel is HBM-bound).
    sig = jax.nn.sigmoid(mask_ref[...].astype(jnp.float32)).astype(jnp.bfloat16)
    o_ref[...] = lax.dot_general(
        probs, sig, dimension_numbers=(((0,), (0,)), ((), ())),
        preferred_element_type=jnp.float32).astype(o_ref.dtype)


def semantic_inference(mask_cls, mask_pred, tile_hw=8192, out_dtype=jnp.bfloat16):
    """mask_cls: [Q, C+1], mask_pred: [Q, H, W] -> semseg [C, H, W]
    == einsum('qc,qhw->chw', softmax(mask_cls)[:, :-1], sigmoid(mask_pred))."""
    Q, Cp1 = mask_cls.shape
    C = Cp1 - 1
    _, H, W = mask_pred.shape
    HW = H * W

    # The [Q, C+1] softmax is tiny -> compute once in XLA, keep it resident in
    # the kernel (no scratch, no pl.when init, plain 1-D parallel grid).
    cls_probs = jax.nn.softmax(mask_cls.astype(jnp.float32), axis=-1)[:, :-1]

    tile_hw, HW_pad = _choose_tile(HW, tile_hw, 128)
    mask_flat = mask_pred.reshape(Q, HW)                # free; keep producer dtype
    if HW_pad != HW:
        mask_flat = jnp.pad(mask_flat, ((0, 0), (0, HW_pad - HW)))
    n_tiles = HW_pad // tile_hw

    out = pl.pallas_call(
        _semantic_inference_kernel,
        out_shape=jax.ShapeDtypeStruct((C, HW_pad), out_dtype),
        grid=(n_tiles,),
        in_specs=[
            pl.BlockSpec((Q, C), lambda i: (0, 0)),         # resident probs
            pl.BlockSpec((Q, tile_hw), lambda i: (0, i)),   # streamed masks
        ],
        out_specs=pl.BlockSpec((C, tile_hw), lambda i: (0, i)),
        compiler_params=pltpu.CompilerParams(
            dimension_semantics=("parallel",),
            vmem_limit_bytes=32 * 1024 * 1024),
    )(cls_probs, mask_flat)

    if HW_pad != HW:
        out = out[:, :HW]
    return out.reshape(C, H, W)


# ----------------------------------------------------------------------------
# Pure-JAX references (exact module semantics, f32) for correctness checking
# ----------------------------------------------------------------------------
def _ref_conv1(images, pixel_mean, pixel_std, conv_w,
               bn_gamma, bn_beta, bn_mean, bn_var, eps=1e-5):
    x = (images - pixel_mean.reshape(1, -1, 1, 1)) / pixel_std.reshape(1, -1, 1, 1)
    y = lax.conv_general_dilated(
        x, conv_w, window_strides=(2, 2), padding=[(3, 3), (3, 3)],
        dimension_numbers=("NCHW", "OIHW", "NCHW"))
    scale = bn_gamma / jnp.sqrt(bn_var + eps)
    shift = bn_beta - bn_mean * scale
    y = y * scale.reshape(1, -1, 1, 1) + shift.reshape(1, -1, 1, 1)
    return jnp.maximum(y, 0.0)


def _ref_semantic_inference(mask_cls, mask_pred):
    cls_sm = jax.nn.softmax(mask_cls, axis=-1)[..., :-1]
    sig = jax.nn.sigmoid(mask_pred.astype(jnp.float32))
    return jnp.einsum("qc,qhw->chw", cls_sm, sig)


# ----------------------------------------------------------------------------
if __name__ == "__main__":
    key = jax.random.PRNGKey(0)
    kimg, kw, kg, kb, km, kv, kcls, kmask = jax.random.split(key, 8)

    # Small shapes consistent with the module (image NCHW, 3 channels,
    # conv1 3->64 7x7/2, Q queries over num_classes+1 logits).
    N, Cin, H, W = 2, 3, 32, 32
    OC, K = 64, 7
    Q, NUM_CLASSES = 12, 4

    images = jax.random.uniform(kimg, (N, Cin, H, W), jnp.float32, 0.0, 255.0)
    pixel_mean = jnp.array([123.675, 116.28, 103.53], jnp.float32)
    pixel_std = jnp.array([58.395, 57.12, 57.375], jnp.float32)

    fan_in = Cin * K * K
    conv_w = jax.random.normal(kw, (OC, Cin, K, K), jnp.float32) * (2.0 / fan_in) ** 0.5

    bn_gamma = 1.0 + 0.1 * jax.random.normal(kg, (OC,), jnp.float32)
    bn_beta = 0.1 * jax.random.normal(kb, (OC,), jnp.float32)
    bn_mean = 0.05 * jax.random.normal(km, (OC,), jnp.float32)
    bn_var = jnp.abs(jax.random.normal(kv, (OC,), jnp.float32)) + 0.5

    # Synthetic sem_seg_head outputs; mask_pred fed in the producer's dtype
    # (bf16) with no repack pass before the kernel.
    mask_cls = jax.random.normal(kcls, (Q, NUM_CLASSES + 1), jnp.float32)
    mask_pred = jax.random.normal(kmask, (Q, H, W), jnp.float32).astype(jnp.bfloat16)

    # Small tiles so the test exercises multi-step grids (defaults: 2048/8192).
    conv1_out = conv1_bn_relu(images, pixel_mean, pixel_std, conv_w,
                              bn_gamma, bn_beta, bn_mean, bn_var, tile_m=128)
    semseg = semantic_inference(mask_cls, mask_pred, tile_hw=256)
    jax.block_until_ready((conv1_out, semseg))

    ref_conv = _ref_conv1(images, pixel_mean, pixel_std, conv_w,
                          bn_gamma, bn_beta, bn_mean, bn_var)
    ref_semseg = _ref_semantic_inference(mask_cls, mask_pred)

    assert conv1_out.shape == (N, OC, H // 2, W // 2)
    assert semseg.shape == (NUM_CLASSES, H, W)
    assert conv1_out.dtype == jnp.bfloat16 and semseg.dtype == jnp.bfloat16

    conv_err = float(jnp.max(jnp.abs(conv1_out.astype(jnp.float32) - ref_conv)))
    sem_err = float(jnp.max(jnp.abs(semseg.astype(jnp.float32) - ref_semseg)))
    # bf16 MXU operands + bf16 outputs with f32 accumulation -> loose tolerances.
    assert jnp.allclose(conv1_out.astype(jnp.float32), ref_conv,
                        rtol=5e-2, atol=1e-1), conv_err
    assert jnp.allclose(semseg.astype(jnp.float32), ref_semseg,
                        rtol=5e-2, atol=5e-2), sem_err

    print("KERNEL_OK")
</pallas_src>

<mosaic_0001>
module attributes {stable_mosaic.version = 11 : i64} {
  func.func @_conv_bn_relu_kernel(%arg0: i32, %arg1: i32, %arg2: memref<64x160xbf16, #tpu.memory_space<vmem>>, %arg3: memref<1x160x128xbf16, #tpu.memory_space<vmem>>, %arg4: memref<64x1xf32, #tpu.memory_space<vmem>>, %arg5: memref<1x64x128xbf16, #tpu.memory_space<vmem>>) attributes {dimension_semantics = [#tpu.dimension_semantics<parallel>, #tpu.dimension_semantics<parallel>], iteration_bounds = array<i64: 2, 2>, scalar_prefetch = 0 : i64, scratch_operands = 0 : i64, tpu.core_type = #tpu.core_type<tc>, window_params = [{pipeline_mode = #tpu.pipeline_mode<synchronous>, transform_indices = @transform_0, window_bounds = array<i64: 64, 160>}, {transform_indices = @transform_1, window_bounds = array<i64: 1, 160, 128>}, {pipeline_mode = #tpu.pipeline_mode<synchronous>, transform_indices = @transform_2, window_bounds = array<i64: 64, 1>}, {transform_indices = @transform_3, window_bounds = array<i64: 1, 64, 128>}]} {
    %c0 = arith.constant 0 : index
    %c0_0 = arith.constant 0 : index
    %0 = vector.load %arg2[%c0, %c0_0] : memref<64x160xbf16, #tpu.memory_space<vmem>>, vector<64x160xbf16>
    %c0_1 = arith.constant 0 : index
    %c0_2 = arith.constant 0 : index
    %c0_3 = arith.constant 0 : index
    %1 = vector.load %arg3[%c0_1, %c0_2, %c0_3] : memref<1x160x128xbf16, #tpu.memory_space<vmem>>, vector<1x160x128xbf16>
    %2 = vector.shape_cast %1 : vector<1x160x128xbf16> to vector<160x128xbf16>
    %cst = arith.constant dense<0.000000e+00> : vector<64x128xf32>
    %3 = tpu.matmul %0, %2, %cst {dimension_numbers = #tpu.dot_dimension_numbers<[1], [0], [0], [1], [0, 0, 1, 1], [], []>} : vector<64x160xbf16>, vector<160x128xbf16>, vector<64x128xf32> -> vector<64x128xf32>
    %c0_4 = arith.constant 0 : index
    %c0_5 = arith.constant 0 : index
    %4 = vector.load %arg4[%c0_4, %c0_5] : memref<64x1xf32, #tpu.memory_space<vmem>>, vector<64x1xf32>
    %5 = vector.broadcast %4 : vector<64x1xf32> to vector<64x128xf32>
    %6 = arith.addf %3, %5 : vector<64x128xf32>
    %cst_6 = arith.constant 0.000000e+00 : f32
    %7 = vector.broadcast %cst_6 : f32 to vector<64x128xf32>
    %8 = arith.maximumf %6, %7 : vector<64x128xf32>
    %9 = arith.truncf %8 : vector<64x128xf32> to vector<64x128xbf16>
    %c0_7 = arith.constant 0 : index
    %c0_8 = arith.constant 0 : index
    %c0_9 = arith.constant 0 : index
    %10 = vector.load %arg5[%c0_7, %c0_8, %c0_9] : memref<1x64x128xbf16, #tpu.memory_space<vmem>>, vector<1x64x128xbf16>
    %11 = vector.shape_cast %10 : vector<1x64x128xbf16> to vector<64x128xbf16>
    %12 = vector.shape_cast %9 : vector<64x128xbf16> to vector<1x64x128xbf16>
    tpu.vector_store %arg5[%c0_7, %c0_8, %c0_9], %12 {strides = array<i32>} : memref<1x64x128xbf16, #tpu.memory_space<vmem>>, vector<1x64x128xbf16>,
    return
  }
  func.func @transform_0(%arg0: i32, %arg1: i32) -> (i32, i32) {
    %c0_i32 = arith.constant 0 : i32
    %c0_i32_0 = arith.constant 0 : i32
    %c0_i32_1 = arith.constant 0 : i32
    return %c0_i32, %c0_i32_0 : i32, i32
  }
  func.func @transform_1(%arg0: i32, %arg1: i32) -> (i32, i32, i32) {
    %c0_i32 = arith.constant 0 : i32
    %c0_i32_0 = arith.constant 0 : i32
    return %arg0, %c0_i32, %arg1 : i32, i32, i32
  }
  func.func @transform_2(%arg0: i32, %arg1: i32) -> (i32, i32) {
    %c0_i32 = arith.constant 0 : i32
    %c0_i32_0 = arith.constant 0 : i32
    %c0_i32_1 = arith.constant 0 : i32
    return %c0_i32, %c0_i32_0 : i32, i32
  }
  func.func @transform_3(%arg0: i32, %arg1: i32) -> (i32, i32, i32) {
    %c0_i32 = arith.constant 0 : i32
    %c0_i32_0 = arith.constant 0 : i32
    return %arg0, %c0_i32, %arg1 : i32, i32, i32
  }
}

</mosaic_0001>

<llo_original>
// kernel: tpu_custom_call.1
$region0: #{tpu_custom_call.1}
  #allocation0 [shape = 'u32[]', space=smem, size = 0x4, offset = 0x4, fixed_abs, tag = 'smem constant byte address 0x4 - core index']
  #allocation1 [shape = 'u32[144,128]{1,0:T(1,128)}', space=vmem, size = 0x12000, scoped, tag = 'internal scratch']
  %s0 = inlined_call_operand.vmem [shape: bf16[64,160], index: 0, kind: input, shape index: {}]
  %s1 = inlined_call_operand.hbm [shape: bf16[2,160,256], index: 1, kind: input, shape index: {}]
  %s2 = inlined_call_operand.vmem [shape: f32[64,1], index: 2, kind: input, shape index: {}]
  %s3 = inlined_call_operand.hbm [shape: bf16[2,64,256], index: 3, kind: output, shape index: {}]
  %s4 = sld [smem:[#allocation0]]
  $region49: #{tpu_custom_call.1} parent=0
    _
  %s6 = ssub.s32 1, %s4
  %s7 = scalar_select 0, %s6, %s4
  $region1: #{tpu_custom_call.1} parent=0
    #allocation2 [shape = 'u8[81920]{0}', space=vmem, size = 0x14000, scoped, tag = 'input window, operand 1']
    #allocation3 [shape = 's32[2]{0}', space=sflag, size = 0x8, scoped, tag = 'scoped memory for tpu_custom_call.1']
    #allocation4 [shape = 's32[2]{0}', space=sflag, size = 0x8, scoped, tag = 'scoped memory for tpu_custom_call.1']
    #allocation5 [shape = 'u8[32768]{0}', space=vmem, size = 0x8000, scoped, tag = 'output window, operand 0']
    %8 = vsyncpa [#allocation3], 0
    %s9 = scalar_lea.sflag [#allocation3], 1
    %10 = vsyncpa %s9, 0
    %11 = vsyncpa [#allocation4], 0
    %s12 = scalar_lea.sflag [#allocation4], 1
    %13 = vsyncpa %s12, 0
    loop: start=0, step=1, limit=6
    $region2: #{tpu_custom_call.1} parent=1 // loop_pre_header
      _
    $region3: #{tpu_custom_call.1} parent=1 // loop_header
      %s15 = sphi 0, %s19
      %p16 = scmp.ge.s32.totalorder %s15, 6
      %s22 = sphi 0, %s34
      %s23 = sphi 0, %s30
      %s24 = sphi 0, %s22
      %s25 = sphi 0, %s23
      %s26 = sphi 0, %s24
      %s27 = sphi 0, %s25
      %s35 = sphi 0, %s35
      %s37 = sphi 0, %s35
      %s38 = sphi 0, %s37
      %s52 = sphi 0, %s38
      %s60 = sphi 0, %s62
      %s63 = sphi 0, %s60
      %s64 = sphi 0, %s63
      %s80 = sphi 0, %s64
      %s84 = sphi 0, %s84
      %s86 = sphi 0, %s84
      %s87 = sphi 0, %s86
      %s101 = sphi 0, %s87
      %s109 = sphi 0, %s111
      %s112 = sphi 0, %s109
      %s113 = sphi 0, %s112
      %s129 = sphi 0, %s113
    $region4: #{tpu_custom_call.1} parent=1 // loop_header_branch
      %18 = sbr.rel (%p16) target = $region8
    $region5: #{tpu_custom_call.1} parent=1 // loop_body
      %s20 = ssub.s32 %s15, 1
      %s21 = ssub.s32 %s15, 2
      %s28 = sadd.s32 1, %s23
      %p29 = scmp.ge.s32.totalorder %s28, 2
      %s30 = scalar_select %p29, 0, %s28
      %s31 = sadd.s32 1, %s22
      %s32 = scalar_select %p29, %s31, %s22
      %p33 = scmp.ge.s32.totalorder %s32, 2
      %s34 = scalar_select %p33, 0, %s32
      %s36 = sadd.s32 %s35, 1
      %p39 = scmp.eq.s32.totalorder %s15, 3
      %p40 = scmp.ne.s32.totalorder %s35, %s37
      %p41 = scmp.eq.s32.totalorder %s15, 0
      %p42 = por %p40, %p41
      %p43 = scmp.ne.s32.totalorder %s35, %s37
      %p44 = scmp.eq.s32.totalorder %s20, 3
      %p45 = por %p43, %p44
      %p46 = scmp.ne.s32.totalorder %s37, %s38
      %p47 = scmp.eq.s32.totalorder %s20, 0
      %p48 = por %p46, %p47
      %p49 = scmp.ne.s32.totalorder %s37, %s38
      %p50 = scmp.eq.s32.totalorder %s21, 3
      %p51 = por %p49, %p50
      %p53 = scmp.ne.s32.totalorder %s38, %s52
      %p54 = scmp.eq.s32.totalorder %s21, 0
      %p55 = por %p53, %p54
      %s56 = ssub.s32 %s22, %s34
      %s57 = ssub.s32 %s23, %s30
      %s58 = sor.u32 %s56, %s57
      %p59 = scmp.eq.s32.totalorder %s58, 0
      %s61 = sadd.s32 %s60, 1
      %s62 = scalar_select %p59, %s60, %s61
      %p65 = pneg %p59
      %p66 = scmp.eq.s32.totalorder %s15, 3
      %p67 = por %p65, %p66
      %p68 = scmp.ne.s32.totalorder %s60, %s63
      %p69 = scmp.eq.s32.totalorder %s15, 0
      %p70 = por %p68, %p69
      %p71 = scmp.ne.s32.totalorder %s60, %s63
      %p72 = scmp.eq.s32.totalorder %s20, 3
      %p73 = por %p71, %p72
      %p74 = scmp.ne.s32.totalorder %s63, %s64
      %p75 = scmp.eq.s32.totalorder %s20, 0
      %p76 = por %p74, %p75
      %p77 = scmp.ne.s32.totalorder %s63, %s64
      %p78 = scmp.eq.s32.totalorder %s21, 3
      %p79 = por %p77, %p78
      %p81 = scmp.ne.s32.totalorder %s64, %s80
      %p82 = scmp.eq.s32.totalorder %s21, 0
      %p83 = por %p81, %p82
      %s85 = sadd.s32 %s84, 1
      %p88 = scmp.eq.s32.totalorder %s15, 3
      %p89 = scmp.ne.s32.totalorder %s84, %s86
      %p90 = scmp.eq.s32.totalorder %s15, 0
      %p91 = por %p89, %p90
      %p92 = scmp.ne.s32.totalorder %s84, %s86
      %p93 = scmp.eq.s32.totalorder %s20, 3
      %p94 = por %p92, %p93
      %p95 = scmp.ne.s32.totalorder %s86, %s87
      %p96 = scmp.eq.s32.totalorder %s20, 0
      %p97 = por %p95, %p96
      %p98 = scmp.ne.s32.totalorder %s86, %s87
      %p99 = scmp.eq.s32.totalorder %s21, 3
      %p100 = por %p98, %p99
      %p102 = scmp.ne.s32.totalorder %s87, %s101
      %p103 = scmp.eq.s32.totalorder %s21, 0
      %p104 = por %p102, %p103
      %s105 = ssub.s32 %s22, %s34
      %s106 = ssub.s32 %s23, %s30
      %s107 = sor.u32 %s105, %s106
      %p108 = scmp.eq.s32.totalorder %s107, 0
      %s110 = sadd.s32 %s109, 1
      %s111 = scalar_select %p108, %s109, %s110
      %p114 = pneg %p108
      %p115 = scmp.eq.s32.totalorder %s15, 3
      %p116 = por %p114, %p115
      %p117 = scmp.ne.s32.totalorder %s109, %s112
      %p118 = scmp.eq.s32.totalorder %s15, 0
      %p119 = por %p117, %p118
      %p120 = scmp.ne.s32.totalorder %s109, %s112
      %p121 = scmp.eq.s32.totalorder %s20, 3
      %p122 = por %p120, %p121
      %p123 = scmp.ne.s32.totalorder %s112, %s113
      %p124 = scmp.eq.s32.totalorder %s20, 0
      %p125 = por %p123, %p124
      %p126 = scmp.ne.s32.totalorder %s112, %s113
      %p127 = scmp.eq.s32.totalorder %s21, 3
      %p128 = por %p126, %p127
      %p130 = scmp.ne.s32.totalorder %s113, %s129
      %p131 = scmp.eq.s32.totalorder %s21, 0
      %p132 = por %p130, %p131
      %p133 = scmp.le.s32.totalorder 1, %s15
      %p134 = scmp.lt.s32.totalorder %s15, 5
      %p135 = pnand %p133, %p134
      %p136 = pneg %p135
      // Predicated region
      $region9: #{tpu_custom_call.1} parent=5 // pred_check
        _
      $region10: #{tpu_custom_call.1} parent=5 // pred_check_branch
        %138 = sbr.rel (%p135) target = $region12
      $region11: #{tpu_custom_call.1} parent=5 // pred_region
        %s139 = ssub.s32 %s15, 1
        // Predicated region
        $region13: #{tpu_custom_call.1} parent=11 // pred_check
          %p140 = pneg %p48
        $region14: #{tpu_custom_call.1} parent=11 // pred_check_branch
          %142 = sbr.rel (%p140) target = $region16
        $region15: #{tpu_custom_call.1} parent=11 // pred_region
          _
        $region16: #{tpu_custom_call.1} parent=11 // pred_fallthru
          _
        // Predicated region
        $region17: #{tpu_custom_call.1} parent=11 // pred_check
          %p143 = pneg %p97
        $region18: #{tpu_custom_call.1} parent=11 // pred_check_branch
          %145 = sbr.rel (%p143) target = $region20
        $region19: #{tpu_custom_call.1} parent=11 // pred_region
          _
        $region20: #{tpu_custom_call.1} parent=11 // pred_fallthru
          _
      $region12: #{tpu_custom_call.1} parent=5 // pred_fallthru
        _
      %p146 = scmp.lt.s32.totalorder %s15, 4
      // Predicated region
      $region21: #{tpu_custom_call.1} parent=5 // pred_check
        %p147 = pneg %p146
      $region22: #{tpu_custom_call.1} parent=5 // pred_check_branch
        %149 = sbr.rel (%p147) target = $region24
      $region23: #{tpu_custom_call.1} parent=5 // pred_region
        // Predicated region
        $region25: #{tpu_custom_call.1} parent=23 // pred_check
          %p150 = pneg %p70
        $region26: #{tpu_custom_call.1} parent=23 // pred_check_branch
          %152 = sbr.rel (%p150) target = $region28
        $region27: #{tpu_custom_call.1} parent=23 // pred_region
          %s153 = sand.u32 %s60, 1
          %s154 = scalar_lea.sflag [#allocation3], %s153
          %s155 = sand.u32 %s60, 1
          %s156 = smul.addr %s155, 80
          %s157 = scalar_lea.vmem [#allocation2], %s156
          %s159 = ssub.s32 1280, 1280
          %160 = vsyncadd %s154, %s159
          %s161 = smul.addr %s22, 40
          %s162 = sadd.s32 %s23, %s161
          %s163 = smul.addr %s162, 64
          %s164 = scalar_lea.hbm %s1, %s163
          %s165 = sshll.u32 %s157, 4
          %s166 = int_to_ptr.vmem [resolvable:$true] %s165
          %171 = dma.hbm_to_vmem [thread:$0]  %s164, 1280, %s166, %s154, 128, 64, 4
        $region28: #{tpu_custom_call.1} parent=23 // pred_fallthru
          _
      $region24: #{tpu_custom_call.1} parent=5 // pred_fallthru
        _
      %p172 = scmp.le.s32.totalorder 1, %s15
      %p173 = scmp.lt.s32.totalorder %s15, 5
      %p174 = pnand %p172, %p173
      %p175 = pneg %p174
      // Predicated region
      $region29: #{tpu_custom_call.1} parent=5 // pred_check
        _
      $region30: #{tpu_custom_call.1} parent=5 // pred_check_branch
        %177 = sbr.rel (%p174) target = $region32
      $region31: #{tpu_custom_call.1} parent=5 // pred_region
        %s178 = ssub.s32 %s15, 1
        %s179 = sand.u32 %s63, 1
        %s180 = scalar_lea.sflag [#allocation3], %s179
        %s181 = sand.u32 %s63, 1
        %s182 = smul.addr %s181, 80
        %s183 = scalar_lea.vmem [#allocation2], %s182
        // Predicated region
        $region33: #{tpu_custom_call.1} parent=31 // pred_check
          %p184 = pneg %p76
        $region34: #{tpu_custom_call.1} parent=31 // pred_check_branch
          %186 = sbr.rel (%p184) target = $region36
        $region35: #{tpu_custom_call.1} parent=31 // pred_region
          %187 = dma.done %s180, 1280
        $region36: #{tpu_custom_call.1} parent=31 // pred_fallthru
          _
        %p188 = pneg %p48
        %p189 = pneg %p45
        %s190 = sand.u32 %s63, 1
        %s191 = scalar_lea.sflag [#allocation3], %s190
        %s192 = sand.u32 %s63, 1
        %s193 = smul.addr %s192, 80
        %s194 = scalar_lea.vmem [#allocation2], %s193
        %p195 = pneg %p76
        %p196 = pneg %p73
        %p197 = pneg %p97
        %p198 = pneg %p94
        %p199 = pneg %p125
        %p200 = pneg %p122
        %s201 = sand.u32 %s112, 1
        %s202 = scalar_lea.sflag [#allocation4], %s201
        %s203 = sand.u32 %s112, 1
        %s204 = smul.addr %s203, 32
        %s205 = scalar_lea.vmem [#allocation5], %s204
        %v207 = vld [vmem:[%s0] sm:$0xff]
        %v208 = vld [vmem:[%s0 + $0x8] sm:$0xff]
        %v209 = vld [vmem:[%s0 + $0x10] sm:$0xff]
        %v210 = vld [vmem:[%s0 + $0x18] sm:$0xff]
        %v211 = vld [vmem:[%s0 + $0x20] sm:$0xff]
        %v212 = vld [vmem:[%s0 + $0x28] sm:$0xff]
        %v213 = vld [vmem:[%s0 + $0x30] sm:$0xff]
        %v214 = vld [vmem:[%s0 + $0x38] sm:$0xff]
        %v215 = vld [vmem:[%s183] sm:$0xf]
        %v216 = vld [vmem:[%s183 + $0x4] sm:$0xf]
        %v217 = vld [vmem:[%s183 + $0x8] sm:$0xf]
        %v218 = vld [vmem:[%s183 + $0xc] sm:$0xf]
        %v219 = vld [vmem:[%s183 + $0x10] sm:$0xf]
        %v220 = vld [vmem:[%s183 + $0x14] sm:$0xf]
        %v221 = vld [vmem:[%s183 + $0x18] sm:$0xf]
        %v222 = vld [vmem:[%s183 + $0x1c] sm:$0xf]
        %v223 = vld [vmem:[%s183 + $0x20] sm:$0xf]
        %v224 = vld [vmem:[%s183 + $0x24] sm:$0xf]
        %v225 = vld [vmem:[%s183 + $0x28] sm:$0xf]
        %v226 = vld [vmem:[%s183 + $0x2c] sm:$0xf]
        %v227 = vld [vmem:[%s183 + $0x30] sm:$0xf]
        %v228 = vld [vmem:[%s183 + $0x34] sm:$0xf]
        %v229 = vld [vmem:[%s183 + $0x38] sm:$0xf]
        %v230 = vld [vmem:[%s183 + $0x3c] sm:$0xf]
        %v231 = vld [vmem:[%s183 + $0x40] sm:$0xf]
        %v232 = vld [vmem:[%s183 + $0x44] sm:$0xf]
        %v233 = vld [vmem:[%s183 + $0x48] sm:$0xf]
        %v234 = vld [vmem:[%s183 + $0x4c] sm:$0xf]
        %v235 = vld [vmem:[%s2] sm:$0xff]
        %v236 = vld [vmem:[%s2 + $0x8] sm:$0xff]
        %v237 = vld [vmem:[%s2 + $0x10] sm:$0xff]
        %v238 = vld [vmem:[%s2 + $0x18] sm:$0xff]
        %v239 = vld [vmem:[%s2 + $0x20] sm:$0xff]
        %v240 = vld [vmem:[%s2 + $0x28] sm:$0xff]
        %v241 = vld [vmem:[%s2 + $0x30] sm:$0xff]
        %v242 = vld [vmem:[%s2 + $0x38] sm:$0xff]
        %244 = vset.pattern.permute.xlu0 0
        %245 = vperm.xlu0 %244, %v235
        %v246 = vpop.permute.xlu0 %245
        %249 = vset.pattern.permute.xlu0 0
        %250 = vperm.xlu0 %249, %v236
        %v251 = vpop.permute.xlu0 %250
        %254 = vset.pattern.permute.xlu0 0
        %255 = vperm.xlu0 %254, %v237
        %v256 = vpop.permute.xlu0 %255
        %259 = vset.pattern.permute.xlu0 0
        %260 = vperm.xlu0 %259, %v238
        %v261 = vpop.permute.xlu0 %260
        %264 = vset.pattern.permute.xlu0 0
        %265 = vperm.xlu0 %264, %v239
        %v266 = vpop.permute.xlu0 %265
        %269 = vset.pattern.permute.xlu0 0
        %270 = vperm.xlu0 %269, %v240
        %v271 = vpop.permute.xlu0 %270
        %274 = vset.pattern.permute.xlu0 0
        %275 = vperm.xlu0 %274, %v241
        %v276 = vpop.permute.xlu0 %275
        %279 = vset.pattern.permute.xlu0 0
        %280 = vperm.xlu0 %279, %v242
        %v281 = vpop.permute.xlu0 %280
        %v291 = vunpack.c.l.b16 %v207
        %v292 = vunpack.c.h.b16 %v207
        %v293 = vunpack.c.l.b16 %v208
        %v294 = vunpack.c.h.b16 %v208
        %v295 = vunpack.c.l.b16 %v209
        %v296 = vunpack.c.h.b16 %v209
        %v297 = vunpack.c.l.b16 %v210
        %v298 = vunpack.c.h.b16 %v210
        %v299 = vunpack.c.l.b16 %v211
        %v300 = vunpack.c.h.b16 %v211
        %v301 = vunpack.c.l.b16 %v212
        %v302 = vunpack.c.h.b16 %v212
        %v303 = vunpack.c.l.b16 %v213
        %v304 = vunpack.c.h.b16 %v213
        %v305 = vunpack.c.l.b16 %v214
        %v306 = vunpack.c.h.b16 %v214
        %v307 = vpack.c.b16 %v293, %v291
        %v308 = vpack.c.b16 %v294, %v292
        %v309 = vpack.c.b16 %v297, %v295
        %v310 = vpack.c.b16 %v298, %v296
        %v311 = vpack.c.b16 %v301, %v299
        %v312 = vpack.c.b16 %v302, %v300
        %v313 = vpack.c.b16 %v305, %v303
        %v314 = vpack.c.b16 %v306, %v304
        %v339 = vunpack.c.l.b16 %v215
        %v340 = vunpack.c.l.b16 %v216
        %v341 = vunpack.c.l.b16 %v217
        %v342 = vunpack.c.l.b16 %v218
        %v343 = vunpack.c.l.b16 %v219
        %v344 = vunpack.c.l.b16 %v220
        %v345 = vunpack.c.l.b16 %v221
        %v346 = vunpack.c.l.b16 %v222
        %v347 = vunpack.c.l.b16 %v223
        %v348 = vunpack.c.l.b16 %v224
        %v349 = vunpack.c.l.b16 %v225
        %v350 = vunpack.c.l.b16 %v226
        %v351 = vunpack.c.l.b16 %v227
        %v352 = vunpack.c.l.b16 %v228
        %v353 = vunpack.c.l.b16 %v229
        %v354 = vunpack.c.l.b16 %v230
        %v355 = vunpack.c.l.b16 %v231
        %v356 = vunpack.c.l.b16 %v232
        %v357 = vunpack.c.l.b16 %v233
        %v358 = vunpack.c.l.b16 %v234
        %v359 = vpack.c.b16 %v340, %v339
        %v360 = vpack.c.b16 %v342, %v341
        %v361 = vpack.c.b16 %v344, %v343
        %v362 = vpack.c.b16 %v346, %v345
        %v363 = vpack.c.b16 %v348, %v347
        %v364 = vpack.c.b16 %v350, %v349
        %v365 = vpack.c.b16 %v352, %v351
        %v366 = vpack.c.b16 %v354, %v353
        %v367 = vpack.c.b16 %v356, %v355
        %v368 = vpack.c.b16 %v358, %v357
        %vm379 = vcmask 261120
        %v381 = vsel %vm379, %v308, 0
        %v384 = vsel %vm379, %v310, 0
        %v387 = vsel %vm379, %v312, 0
        %v390 = vsel %vm379, %v314, 0
        %392 = vmatprep.subr.bf16.mxu0 0
        %393 = vmatpush1.bf16.msra.mxu0 %v359
        %394 = vmatprep.subr.bf16.mxu0 0
        %395 = vmatpush1.bf16.msra.mxu0 %v360
        %396 = vmatprep.subr.bf16.mxu0 0
        %397 = vmatpush1.bf16.msra.mxu0 %v361
        %398 = vmatprep.subr.bf16.mxu0 0
        %399 = vmatpush1.bf16.msra.mxu0 %v362
        %400 = vmatprep.subr.bf16.mxu0 0
        %401 = vmatpush1.bf16.msra.mxu0 %v363
        %402 = vmatprep.subr.bf16.mxu0 0
        %403 = vmatpush1.bf16.msra.mxu0 %v364
        %404 = vmatprep.subr.bf16.mxu0 0
        %405 = vmatpush1.bf16.msra.mxu0 %v365
        %406 = vmatprep.subr.bf16.mxu0 0
        %407 = vmatpush1.bf16.msra.mxu0 %v366
        %408 = vmatprep.subr.bf16.mxu0 0
        %409 = vmatpush1.bf16.msra.mxu0 %v367
        %410 = vmatprep.subr.bf16.mxu0 0
        %411 = vmatpush1.bf16.msra.mxu0 %v368
        %412 = vmatprep.subr.bf16.mxu0 0
        %413 = vmatpush1.bf16.msra.mxu0 0
        %414 = vmatprep.subr.bf16.mxu0 0
        %415 = vmatpush1.bf16.msra.mxu0 0
        %416 = vmatprep.subr.bf16.mxu0 0
        %417 = vmatpush1.bf16.msra.mxu0 0
        %418 = vmatprep.subr.bf16.mxu0 0
        %419 = vmatpush1.bf16.msra.mxu0 0
        %420 = vmatprep.subr.bf16.mxu0 0
        %421 = vmatpush1.bf16.msra.mxu0 0
        %422 = vmatprep.subr.bf16.mxu0 0
        %423 = vmatpush1.bf16.msra.mxu0 0
        %424 = vmatprep.mubr.bf16.mxu0 %v381
        %425 = vmatmul.mubr.bf16.gmra.mrb[0].mxu0 %v307
        %v426 = vpop.f32.mrb[0].mxu0
        %v427 = vadd.f32 %v246, %v426
        %v428 = vpop.f32.mrb[0].mxu0
        %v429 = vpop.f32.mrb[0].mxu0
        %v430 = vadd.f32 %v251, %v429
        %v431 = vpop.f32.mrb[0].mxu0
        %432 = vmatprep.mubr.bf16.mxu0 %v384
        %433 = vmatmul.mubr.bf16.gmra.mrb[0].mxu0 %v309
        %v434 = vpop.f32.mrb[0].mxu0
        %v435 = vadd.f32 %v256, %v434
        %v436 = vpop.f32.mrb[0].mxu0
        %v437 = vpop.f32.mrb[0].mxu0
        %v438 = vadd.f32 %v261, %v437
        %v439 = vpop.f32.mrb[0].mxu0
        %440 = vmatprep.mubr.bf16.mxu0 %v387
        %441 = vmatmul.mubr.bf16.gmra.mrb[0].mxu0 %v311
        %v442 = vpop.f32.mrb[0].mxu0
        %v443 = vadd.f32 %v266, %v442
        %v444 = vpop.f32.mrb[0].mxu0
        %v445 = vpop.f32.mrb[0].mxu0
        %v446 = vadd.f32 %v271, %v445
        %v447 = vpop.f32.mrb[0].mxu0
        %448 = vmatprep.mubr.bf16.mxu0 %v390
        %449 = vmatmul.mubr.bf16.gmra.mrb[0].mxu0 %v313
        %v450 = vpop.f32.mrb[0].mxu0
        %v451 = vadd.f32 %v276, %v450
        %v452 = vpop.f32.mrb[0].mxu0
        %v453 = vpop.f32.mrb[0].mxu0
        %v454 = vadd.f32 %v281, %v453
        %v455 = vpop.f32.mrb[0].mxu0
        %456 = vdwg.mxu0
        %v457 = vmax.f32 %v427, 0.0
        %v458 = vmax.f32 %v430, 0.0
        %v459 = vmax.f32 %v435, 0.0
        %v460 = vmax.f32 %v438, 0.0
        %v461 = vmax.f32 %v443, 0.0
        %v462 = vmax.f32 %v446, 0.0
        %v463 = vmax.f32 %v451, 0.0
        %v464 = vmax.f32 %v454, 0.0
        %v465 = vpack.c.bf16 %v458, %v457
        %v466 = vpack.c.bf16 %v460, %v459
        %v467 = vpack.c.bf16 %v462, %v461
        %v468 = vpack.c.bf16 %v464, %v463
        %v473 = vunpack.c.l.b16 %v465
        %v474 = vunpack.c.h.b16 %v465
        %v475 = vunpack.c.l.b16 %v466
        %v476 = vunpack.c.h.b16 %v466
        %v477 = vunpack.c.l.b16 %v467
        %v478 = vunpack.c.h.b16 %v467
        %v479 = vunpack.c.l.b16 %v468
        %v480 = vunpack.c.h.b16 %v468
        %v481 = vpack.c.b16 %v473, %v473
        %v482 = vpack.c.b16 %v474, %v474
        %v483 = vpack.c.b16 %v475, %v475
        %v484 = vpack.c.b16 %v476, %v476
        %v485 = vpack.c.b16 %v477, %v477
        %v486 = vpack.c.b16 %v478, %v478
        %v487 = vpack.c.b16 %v479, %v479
        %v488 = vpack.c.b16 %v480, %v480
        %497 = vst [vmem:[%s205] sm:$0xf] %v481
        %498 = vst [vmem:[%s205 + $0x4] sm:$0xf] %v482
        %499 = vst [vmem:[%s205 + $0x8] sm:$0xf] %v483
        %500 = vst [vmem:[%s205 + $0xc] sm:$0xf] %v484
        %501 = vst [vmem:[%s205 + $0x10] sm:$0xf] %v485
        %502 = vst [vmem:[%s205 + $0x14] sm:$0xf] %v486
        %503 = vst [vmem:[%s205 + $0x18] sm:$0xf] %v487
        %504 = vst [vmem:[%s205 + $0x1c] sm:$0xf] %v488
        %s505 = sand.u32 %s112, 1
        %s506 = scalar_lea.sflag [#allocation4], %s505
        %s507 = sand.u32 %s112, 1
        %s508 = smul.addr %s507, 32
        %s509 = scalar_lea.vmem [#allocation5], %s508
        // Predicated region
        $region37: #{tpu_custom_call.1} parent=31 // pred_check
          %p510 = pneg %p122
        $region38: #{tpu_custom_call.1} parent=31 // pred_check_branch
          %512 = sbr.rel (%p510) target = $region40
        $region39: #{tpu_custom_call.1} parent=31 // pred_region
          %s514 = ssub.s32 512, 512
          %515 = vsyncadd %s506, %s514
          %s516 = smul.addr %s24, 16
          %s517 = sadd.s32 %s25, %s516
          %s518 = smul.addr %s517, 64
          %s519 = scalar_lea.hbm %s3, %s518
          %s520 = sshll.u32 %s509, 4
          %s521 = int_to_ptr.vmem [resolvable:$true] %s520
          %526 = dma.vmem_to_hbm [thread:$0]  %s521, 512, %s519, %s506, 64, 128, 4
        $region40: #{tpu_custom_call.1} parent=31 // pred_fallthru
          _
      $region32: #{tpu_custom_call.1} parent=5 // pred_fallthru
        _
      %p527 = scmp.le.s32.totalorder 2, %s15
      // Predicated region
      $region41: #{tpu_custom_call.1} parent=5 // pred_check
        %p528 = pneg %p527
      $region42: #{tpu_custom_call.1} parent=5 // pred_check_branch
        %530 = sbr.rel (%p528) target = $region44
      $region43: #{tpu_custom_call.1} parent=5 // pred_region
        %s531 = ssub.s32 %s15, 2
        // Predicated region
        $region45: #{tpu_custom_call.1} parent=43 // pred_check
          %p532 = pneg %p128
        $region46: #{tpu_custom_call.1} parent=43 // pred_check_branch
          %534 = sbr.rel (%p532) target = $region48
        $region47: #{tpu_custom_call.1} parent=43 // pred_region
          %s535 = sand.u32 %s113, 1
          %s536 = scalar_lea.sflag [#allocation4], %s535
          %s537 = sand.u32 %s113, 1
          %s538 = smul.addr %s537, 32
          %s539 = scalar_lea.vmem [#allocation5], %s538
          %540 = dma.done %s536, 512
        $region48: #{tpu_custom_call.1} parent=43 // pred_fallthru
          _
      $region44: #{tpu_custom_call.1} parent=5 // pred_fallthru
        _
    $region6: #{tpu_custom_call.1} parent=1 // loop_footer
      %s19 = sadd.s32 1, %s15
    $region7: #{tpu_custom_call.1} parent=1 // loop_footer_branch
      %14 = sbr.rel target = $region3
    $region8: #{tpu_custom_call.1} parent=1 // loop_exit
      _
    %541 = vsyncpa [#allocation3], 1
    %s542 = scalar_lea.sflag [#allocation3], 1
    %543 = vsyncpa %s542, 1
    %544 = vsyncpa [#allocation4], 1
    %s545 = scalar_lea.sflag [#allocation4], 1
    %546 = vsyncpa %s545, 1

</llo_original>
